<compile_context>
chip_gen: v7x
topology: tpu7x:2x2x1
jax: 0.10.0
libtpu: 0.0.40
codegen_flags: <defaults>
</compile_context>

<pallas_src>
import functools

import jax
import jax.numpy as jnp
from jax.experimental import pallas as pl
from jax.experimental.pallas import tpu as pltpu


def _dice_sums_kernel(p_ref, t_ref, num_ref, den_ref, num_acc, den_acc, *,
                      spatial, tile_rows, tile_cols, mask_cols, lane_dense):
    """Per-row partial sums: num = sum(sigmoid(p)*t), den = sum(sigmoid(p)^2 + t^2)."""
    j = pl.program_id(1)

    @pl.when(j == 0)
    def _init():
        num_acc[...] = jnp.zeros_like(num_acc)
        den_acc[...] = jnp.zeros_like(den_acc)

    x = p_ref[...].astype(jnp.float32)
    t = t_ref[...].astype(jnp.float32)

    # sigmoid(x) = 0.5 * tanh(0.5 * x) + 0.5  -> one EUP op (vs exp + recip).
    p = 0.5 * jnp.tanh(0.5 * x) + 0.5

    num_term = p * t
    den_term = p * p + t * t

    if mask_cols:
        # Ragged trailing column block: zero out-of-range lanes so the
        # unspecified data read by the padded DMA never reaches the sums.
        col = jax.lax.broadcasted_iota(jnp.int32, (tile_rows, tile_cols), 1)
        valid = (col + j * tile_cols) < spatial
        num_term = jnp.where(valid, num_term, 0.0)
        den_term = jnp.where(valid, den_term, 0.0)

    if lane_dense:
        # Lane-dense accumulation: in-lane VPU adds per 128-wide chunk.
        n_chunks = tile_cols // 128
        num_part = num_term[:, 0:128]
        den_part = den_term[:, 0:128]
        for c in range(1, n_chunks):
            sl = slice(c * 128, (c + 1) * 128)
            num_part = num_part + num_term[:, sl]
            den_part = den_part + den_term[:, sl]
        num_acc[...] += num_part
        den_acc[...] += den_part
    else:
        num_acc[...] += jnp.sum(num_term, axis=1, keepdims=True)
        den_acc[...] += jnp.sum(den_term, axis=1, keepdims=True)

    @pl.when(j == pl.num_programs(1) - 1)
    def _finalize():
        if lane_dense:
            # Single cross-lane reduce + narrow store, once per row block.
            num_ref[...] = jnp.sum(num_acc[...], axis=1, keepdims=True)
            den_ref[...] = jnp.sum(den_acc[...], axis=1, keepdims=True)
        else:
            num_ref[...] = num_acc[...]
            den_ref[...] = den_acc[...]


def _vmem_capacity_bytes():
    try:
        return int(pltpu.get_tpu_info().vmem_capacity_bytes)
    except Exception:
        return 64 * 1024 * 1024  # conservative: v7x per-TC VMEM


def _choose_tiles(nc, spatial, in_itemsize):
    """Pick (tile_rows, tile_cols) targeting a few MiB per input block."""
    ROW_CAP, COL_CAP = 256, 4096
    vmem_cap = _vmem_capacity_bytes()
    # Budget for the two double-buffered input streams.
    budget = min(vmem_cap // 2, 48 * 1024 * 1024)

    # Rows: full dim when it fits (exempts the sublane-multiple constraint and
    # avoids any row raggedness); otherwise a 256-row block (multiple of 8/16).
    tile_rows = nc if nc <= ROW_CAP else ROW_CAP

    max_tile_elems = max(budget // (2 * in_itemsize), 8 * 128)
    col_budget = max(((max_tile_elems // max(tile_rows, 1)) // 128) * 128, 128)
    col_cap = min(COL_CAP, col_budget)

    # Cols: full dim when small (no mask needed, exempt from the 128-multiple
    # rule); otherwise a large lane-aligned block with in-kernel masking of
    # the ragged trailing block.
    tile_cols = spatial if spatial <= col_cap else col_cap
    return tile_rows, tile_cols, vmem_cap


@functools.partial(jax.jit, static_argnames=("smooth",))
def dice_loss(predict, target, smooth=1.0):
    """DiceLoss.forward with weight=None, ignore_index=None, reduction='mean', p=2."""
    assert predict.shape == target.shape, "predict & target shape do not match"
    N, C = predict.shape[0], predict.shape[1]
    spatial = 1
    for d in predict.shape[2:]:
        spatial *= d
    NC = N * C

    p2 = predict.reshape(NC, spatial)
    t2 = target.reshape(NC, spatial)
    in_itemsize = p2.dtype.itemsize + t2.dtype.itemsize

    tile_rows, tile_cols, vmem_cap = _choose_tiles(NC, spatial, in_itemsize)

    grid_rows = (NC + tile_rows - 1) // tile_rows
    grid_cols = (spatial + tile_cols - 1) // tile_cols
    rows_out = grid_rows * tile_rows

    mask_cols = (spatial % tile_cols) != 0
    lane_dense = (tile_cols % 128 == 0)
    acc_width = 128 if lane_dense else 1

    # Explicit VMEM limit: 2 inputs x 2 pipeline buffers + accumulators + outs.
    needed = (2 * tile_rows * tile_cols * in_itemsize
              + 2 * tile_rows * acc_width * 4
              + 4 * tile_rows * 4)
    vmem_limit = int(min(max(needed + (8 << 20), 32 << 20),
                         max(vmem_cap * 3 // 4, 32 << 20)))

    kernel = functools.partial(
        _dice_sums_kernel,
        spatial=spatial, tile_rows=tile_rows, tile_cols=tile_cols,
        mask_cols=mask_cols, lane_dense=lane_dense)

    num_sums, den_sums = pl.pallas_call(
        kernel,
        out_shape=(
            jax.ShapeDtypeStruct((rows_out, 1), jnp.float32),
            jax.ShapeDtypeStruct((rows_out, 1), jnp.float32),
        ),
        grid_spec=pltpu.PrefetchScalarGridSpec(
            num_scalar_prefetch=0,
            grid=(grid_rows, grid_cols),
            in_specs=[
                pl.BlockSpec((tile_rows, tile_cols), lambda i, j: (i, j)),
                pl.BlockSpec((tile_rows, tile_cols), lambda i, j: (i, j)),
            ],
            out_specs=[
                pl.BlockSpec((tile_rows, 1), lambda i, j: (i, 0)),
                pl.BlockSpec((tile_rows, 1), lambda i, j: (i, 0)),
            ],
            scratch_shapes=[
                pltpu.VMEM((tile_rows, acc_width), jnp.float32),
                pltpu.VMEM((tile_rows, acc_width), jnp.float32),
            ],
        ),
        compiler_params=pltpu.CompilerParams(
            dimension_semantics=("parallel", "arbitrary"),
            vmem_limit_bytes=vmem_limit),
    )(p2, t2)

    num = num_sums[:NC, 0].reshape(N, C) + smooth
    den = den_sums[:NC, 0].reshape(N, C) + smooth
    per_nc_loss = 1.0 - num / den            # BinaryDiceLoss per (n, c)
    per_class = per_nc_loss.mean(axis=0)     # reduction='mean' over batch
    total = per_class.sum() / C              # DiceLoss: sum over classes / C
    return total


def _reference(predict, target, smooth=1.0):
    """Pure-JAX reference mirroring the PyTorch code."""
    N, C = predict.shape[0], predict.shape[1]
    p = jax.nn.sigmoid(predict).reshape(N, C, -1)
    t = target.reshape(N, C, -1)
    total = 0.0
    for i in range(C):
        pi, ti = p[:, i], t[:, i]
        num = jnp.sum(pi * ti, axis=1) + smooth
        den = jnp.sum(pi ** 2 + ti ** 2, axis=1) + smooth
        total = total + jnp.mean(1.0 - num / den)
    return total / C


if __name__ == "__main__":
    key = jax.random.PRNGKey(0)
    k1, k2, k3, k4 = jax.random.split(key, 4)

    # Primary test: NCHW logits + one-hot-ish binary targets.
    N, C, H, W = 2, 4, 16, 16
    predict = jax.random.normal(k1, (N, C, H, W), dtype=jnp.float32)
    target = (jax.random.uniform(k2, (N, C, H, W)) > 0.5).astype(jnp.float32)

    out = jax.block_until_ready(dice_loss(predict, target))
    ref = _reference(predict, target)
    assert jnp.allclose(out, ref, atol=1e-5, rtol=1e-5), (out, ref)

    # Secondary test: spatial not a multiple of the column tile -> exercises
    # the in-kernel ragged-column masking path (no jnp.pad anywhere).
    N2, C2, H2, W2 = 2, 4, 50, 100   # spatial = 5000
    p_b = jax.random.normal(k3, (N2, C2, H2, W2), dtype=jnp.float32)
    t_b = (jax.random.uniform(k4, (N2, C2, H2, W2)) > 0.5).astype(jnp.float32)
    out_b = jax.block_until_ready(dice_loss(p_b, t_b))
    ref_b = _reference(p_b, t_b)
    assert jnp.allclose(out_b, ref_b, atol=1e-5, rtol=1e-5), (out_b, ref_b)

    print("KERNEL_OK")
</pallas_src>

<mosaic_0001>
module attributes {stable_mosaic.version = 11 : i64} {
  func.func @_dice_sums_kernel(%arg0: i32, %arg1: i32, %arg2: memref<8x256xf32, #tpu.memory_space<vmem>>, %arg3: memref<8x256xf32, #tpu.memory_space<vmem>>, %arg4: memref<8x1xf32, #tpu.memory_space<vmem>>, %arg5: memref<8x1xf32, #tpu.memory_space<vmem>>, %arg6: memref<8x128xf32, #tpu.memory_space<vmem>>, %arg7: memref<8x128xf32, #tpu.memory_space<vmem>>) attributes {dimension_semantics = [#tpu.dimension_semantics<parallel>, #tpu.dimension_semantics<arbitrary>], iteration_bounds = array<i64: 1, 1>, scalar_prefetch = 0 : i64, scratch_operands = 2 : i64, tpu.core_type = #tpu.core_type<tc>, window_params = [{transform_indices = @transform_0, window_bounds = array<i64: 8, 256>}, {transform_indices = @transform_1, window_bounds = array<i64: 8, 256>}, {transform_indices = @transform_2, window_bounds = array<i64: 8, 1>}, {transform_indices = @transform_3, window_bounds = array<i64: 8, 1>}]} {
    %c0_i32 = arith.constant 0 : i32
    %0 = arith.cmpi eq, %arg1, %c0_i32 : i32
    %1 = arith.extui %0 : i1 to i32
    %c0_i32_0 = arith.constant 0 : i32
    %2 = arith.cmpi ne, %1, %c0_i32_0 : i32
    scf.if %2 {
      %cst_16 = arith.constant 0.000000e+00 : f32
      %31 = vector.broadcast %cst_16 : f32 to vector<8x128xf32>
      %c0_17 = arith.constant 0 : index
      %c0_18 = arith.constant 0 : index
      %32 = vector.load %arg6[%c0_17, %c0_18] : memref<8x128xf32, #tpu.memory_space<vmem>>, vector<8x128xf32>
      tpu.vector_store %arg6[%c0_17, %c0_18], %31 {strides = array<i32>} : memref<8x128xf32, #tpu.memory_space<vmem>>, vector<8x128xf32>,
      %cst_19 = arith.constant 0.000000e+00 : f32
      %33 = vector.broadcast %cst_19 : f32 to vector<8x128xf32>
      %c0_20 = arith.constant 0 : index
      %c0_21 = arith.constant 0 : index
      %34 = vector.load %arg7[%c0_20, %c0_21] : memref<8x128xf32, #tpu.memory_space<vmem>>, vector<8x128xf32>
      tpu.vector_store %arg7[%c0_20, %c0_21], %33 {strides = array<i32>} : memref<8x128xf32, #tpu.memory_space<vmem>>, vector<8x128xf32>,
    } else {
    }
    %c0 = arith.constant 0 : index
    %c0_1 = arith.constant 0 : index
    %3 = vector.load %arg2[%c0, %c0_1] : memref<8x256xf32, #tpu.memory_space<vmem>>, vector<8x256xf32>
    %c0_2 = arith.constant 0 : index
    %c0_3 = arith.constant 0 : index
    %4 = vector.load %arg3[%c0_2, %c0_3] : memref<8x256xf32, #tpu.memory_space<vmem>>, vector<8x256xf32>
    %cst = arith.constant 5.000000e-01 : f32
    %5 = vector.broadcast %cst : f32 to vector<8x256xf32>
    %6 = arith.mulf %5, %3 : vector<8x256xf32>
    %7 = math.tanh %6 : vector<8x256xf32>
    %cst_4 = arith.constant 5.000000e-01 : f32
    %8 = vector.broadcast %cst_4 : f32 to vector<8x256xf32>
    %9 = arith.mulf %8, %7 : vector<8x256xf32>
    %cst_5 = arith.constant 5.000000e-01 : f32
    %10 = vector.broadcast %cst_5 : f32 to vector<8x256xf32>
    %11 = arith.addf %9, %10 : vector<8x256xf32>
    %12 = arith.mulf %11, %4 : vector<8x256xf32>
    %13 = arith.mulf %11, %11 : vector<8x256xf32>
    %14 = arith.mulf %4, %4 : vector<8x256xf32>
    %15 = arith.addf %13, %14 : vector<8x256xf32>
    %16 = vector.extract_strided_slice %12 {offsets = [0, 0], sizes = [8, 128], strides = [1, 1]} : vector<8x256xf32> to vector<8x128xf32>
    %17 = vector.extract_strided_slice %15 {offsets = [0, 0], sizes = [8, 128], strides = [1, 1]} : vector<8x256xf32> to vector<8x128xf32>
    %18 = vector.extract_strided_slice %12 {offsets = [0, 128], sizes = [8, 128], strides = [1, 1]} : vector<8x256xf32> to vector<8x128xf32>
    %19 = arith.addf %16, %18 : vector<8x128xf32>
    %20 = vector.extract_strided_slice %15 {offsets = [0, 128], sizes = [8, 128], strides = [1, 1]} : vector<8x256xf32> to vector<8x128xf32>
    %21 = arith.addf %17, %20 : vector<8x128xf32>
    %c0_6 = arith.constant 0 : index
    %c0_7 = arith.constant 0 : index
    %22 = vector.load %arg6[%c0_6, %c0_7] : memref<8x128xf32, #tpu.memory_space<vmem>>, vector<8x128xf32>
    %23 = arith.addf %22, %19 : vector<8x128xf32>
    %c0_8 = arith.constant 0 : index
    %c0_9 = arith.constant 0 : index
    %24 = vector.load %arg6[%c0_8, %c0_9] : memref<8x128xf32, #tpu.memory_space<vmem>>, vector<8x128xf32>
    tpu.vector_store %arg6[%c0_8, %c0_9], %23 {strides = array<i32>} : memref<8x128xf32, #tpu.memory_space<vmem>>, vector<8x128xf32>,
    %c0_10 = arith.constant 0 : index
    %c0_11 = arith.constant 0 : index
    %25 = vector.load %arg7[%c0_10, %c0_11] : memref<8x128xf32, #tpu.memory_space<vmem>>, vector<8x128xf32>
    %26 = arith.addf %25, %21 : vector<8x128xf32>
    %c0_12 = arith.constant 0 : index
    %c0_13 = arith.constant 0 : index
    %27 = vector.load %arg7[%c0_12, %c0_13] : memref<8x128xf32, #tpu.memory_space<vmem>>, vector<8x128xf32>
    tpu.vector_store %arg7[%c0_12, %c0_13], %26 {strides = array<i32>} : memref<8x128xf32, #tpu.memory_space<vmem>>, vector<8x128xf32>,
    %c0_i32_14 = arith.constant 0 : i32
    %28 = arith.cmpi eq, %arg1, %c0_i32_14 : i32
    %29 = arith.extui %28 : i1 to i32
    %c0_i32_15 = arith.constant 0 : i32
    %30 = arith.cmpi ne, %29, %c0_i32_15 : i32
    scf.if %30 {
      %c0_16 = arith.constant 0 : index
      %c0_17 = arith.constant 0 : index
      %31 = vector.load %arg6[%c0_16, %c0_17] : memref<8x128xf32, #tpu.memory_space<vmem>>, vector<8x128xf32>
      %cst_18 = arith.constant dense<0.000000e+00> : vector<8xf32>
      %32 = vector.multi_reduction <add>, %31, %cst_18 [1] : vector<8x128xf32> to vector<8xf32>
      %33 = vector.shape_cast %32 : vector<8xf32> to vector<8x1xf32>
      %c0_19 = arith.constant 0 : index
      %c0_20 = arith.constant 0 : index
      %34 = vector.load %arg4[%c0_19, %c0_20] : memref<8x1xf32, #tpu.memory_space<vmem>>, vector<8x1xf32>
      tpu.vector_store %arg4[%c0_19, %c0_20], %33 {strides = array<i32>} : memref<8x1xf32, #tpu.memory_space<vmem>>, vector<8x1xf32>,
      %c0_21 = arith.constant 0 : index
      %c0_22 = arith.constant 0 : index
      %35 = vector.load %arg7[%c0_21, %c0_22] : memref<8x128xf32, #tpu.memory_space<vmem>>, vector<8x128xf32>
      %cst_23 = arith.constant dense<0.000000e+00> : vector<8xf32>
      %36 = vector.multi_reduction <add>, %35, %cst_23 [1] : vector<8x128xf32> to vector<8xf32>
      %37 = vector.shape_cast %36 : vector<8xf32> to vector<8x1xf32>
      %c0_24 = arith.constant 0 : index
      %c0_25 = arith.constant 0 : index
      %38 = vector.load %arg5[%c0_24, %c0_25] : memref<8x1xf32, #tpu.memory_space<vmem>>, vector<8x1xf32>
      tpu.vector_store %arg5[%c0_24, %c0_25], %37 {strides = array<i32>} : memref<8x1xf32, #tpu.memory_space<vmem>>, vector<8x1xf32>,
    } else {
    }
    return
  }
  func.func @transform_0(%arg0: i32, %arg1: i32) -> (i32, i32) {
    %c0_i32 = arith.constant 0 : i32
    return %arg0, %arg1 : i32, i32
  }
  func.func @transform_1(%arg0: i32, %arg1: i32) -> (i32, i32) {
    %c0_i32 = arith.constant 0 : i32
    return %arg0, %arg1 : i32, i32
  }
  func.func @transform_2(%arg0: i32, %arg1: i32) -> (i32, i32) {
    %c0_i32 = arith.constant 0 : i32
    %c0_i32_0 = arith.constant 0 : i32
    return %arg0, %c0_i32 : i32, i32
  }
  func.func @transform_3(%arg0: i32, %arg1: i32) -> (i32, i32) {
    %c0_i32 = arith.constant 0 : i32
    %c0_i32_0 = arith.constant 0 : i32
    return %arg0, %c0_i32 : i32, i32
  }
}

</mosaic_0001>

<llo_original>
// kernel: dice_loss.1
$region0: #{dice_loss.1}
  #allocation0 [shape = 'u32[]', space=smem, size = 0x4, offset = 0x4, fixed_abs, tag = 'smem constant byte address 0x4 - core index']
  #allocation1 [shape = 'u32[144,128]{1,0:T(1,128)}', space=vmem, size = 0x12000, scoped, tag = 'internal scratch']
  #allocation2 [shape = 'f32[8,128]{1,0:T(8,128)}', space=vmem, size = 0x1000, scoped, tag = 'scratch operand']
  #allocation3 [shape = 'f32[8,128]{1,0:T(8,128)}', space=vmem, size = 0x1000, scoped, tag = 'scratch operand']
  %s0 = inlined_call_operand.vmem [shape: f32[8,256], index: 0, kind: input, shape index: {}]
  %s1 = inlined_call_operand.vmem [shape: f32[8,256], index: 1, kind: input, shape index: {}]
  %s2 = inlined_call_operand.vmem [shape: f32[8,1], index: 2, kind: output, shape index: {0}]
  %s3 = inlined_call_operand.vmem [shape: f32[8,1], index: 3, kind: output, shape index: {1}]
  %4 = xla_tuple %s2, %s3
  %s5 = sld [smem:[#allocation0]]
  $region34: #{dice_loss.1} parent=0
    _
  %s7 = ssub.s32 1, %s5
  %s8 = scalar_select 0, %s7, %s5
  // Predicated region
  $region2: #{dice_loss.1} parent=0 // pred_check
    _
  $region3: #{dice_loss.1} parent=0 // pred_check_branch
    %10 = sbr.rel (0) target = $region5
  $region4: #{dice_loss.1} parent=0 // pred_region
    _
  $region5: #{dice_loss.1} parent=0 // pred_fallthru
    _
  // Predicated region
  $region6: #{dice_loss.1} parent=0 // pred_check
    _
  $region7: #{dice_loss.1} parent=0 // pred_check_branch
    %12 = sbr.rel (0) target = $region9
  $region8: #{dice_loss.1} parent=0 // pred_region
    _
  $region9: #{dice_loss.1} parent=0 // pred_fallthru
    _
  %p13 = scmp.eq.s32.totalorder 0, 0
  // Predicated region
  $region10: #{dice_loss.1} parent=0 // pred_check
    %p14 = pneg %p13
  $region11: #{dice_loss.1} parent=0 // pred_check_branch
    %16 = sbr.rel (%p14) target = $region13
  $region12: #{dice_loss.1} parent=0 // pred_region
    %17 = vst [vmem:[#allocation2] sm:$0xff] 0.0
    %18 = vst [vmem:[#allocation3] sm:$0xff] 0.0
  $region13: #{dice_loss.1} parent=0 // pred_fallthru
    _
  %v19 = vld [vmem:[%s0] sm:$0xff]
  %v20 = vld [vmem:[%s0 + $0x8] sm:$0xff]
  %v21 = vld [vmem:[%s1] sm:$0xff]
  %v22 = vld [vmem:[%s1 + $0x8] sm:$0xff]
  %v23 = vmul.f32 %v19, 0.5
  %v24 = vmul.f32 %v20, 0.5
  %v25 = vtanh.pop %v23
  %v26 = vtanh.pop %v24
  %v27 = vmul.f32 %v25, 0.5
  %v28 = vmul.f32 %v26, 0.5
  %v29 = vadd.f32 %v27, 0.5
  %v30 = vadd.f32 %v28, 0.5
  %v31 = vmul.f32 %v29, %v21
  %v32 = vmul.f32 %v30, %v22
  %v33 = vmul.f32 %v29, %v29
  %v34 = vmul.f32 %v30, %v30
  %v35 = vmul.f32 %v21, %v21
  %v36 = vmul.f32 %v22, %v22
  %v37 = vadd.f32 %v33, %v35
  %v38 = vadd.f32 %v34, %v36
  %v39 = vadd.f32 %v31, %v32
  %v40 = vadd.f32 %v37, %v38
  %v41 = vld [vmem:[#allocation2] sm:$0xff]
  %v42 = vadd.f32 %v41, %v39
  %43 = vst [vmem:[#allocation2] sm:$0xff] %v42
  %v44 = vld [vmem:[#allocation3] sm:$0xff]
  %v45 = vadd.f32 %v44, %v40
  %46 = vst [vmem:[#allocation3] sm:$0xff] %v45
  // Predicated region
  $region14: #{dice_loss.1} parent=0 // pred_check
    %p47 = pneg %p13
  $region15: #{dice_loss.1} parent=0 // pred_check_branch
    %49 = sbr.rel (%p47) target = $region17
  $region16: #{dice_loss.1} parent=0 // pred_region
    %v50 = vld [vmem:[#allocation2] sm:$0xff]
    %51 = vadd.xlane.f32.xlu0 %v50
    %v52 = vpop.xlane.xlu0 %51
    %vm53 = vcmask 7168
    %54 = vst.msk [vmem:[%s2] sm:$0xff] %vm53, %v52
    %v55 = vld [vmem:[#allocation3] sm:$0xff]
    %56 = vadd.xlane.f32.xlu0 %v55
    %v57 = vpop.xlane.xlu0 %56
    %58 = vst.msk [vmem:[%s3] sm:$0xff] %vm53, %v57
  $region17: #{dice_loss.1} parent=0 // pred_fallthru
    _
  // Predicated region
  $region18: #{dice_loss.1} parent=0 // pred_check
    _
  $region19: #{dice_loss.1} parent=0 // pred_check_branch
    %60 = sbr.rel (0) target = $region21
  $region20: #{dice_loss.1} parent=0 // pred_region
    _
  $region21: #{dice_loss.1} parent=0 // pred_fallthru
    _
  // Predicated region
  $region22: #{dice_loss.1} parent=0 // pred_check
    _
  $region23: #{dice_loss.1} parent=0 // pred_check_branch
    %62 = sbr.rel (0) target = $region25
  $region24: #{dice_loss.1} parent=0 // pred_region
    _
  $region25: #{dice_loss.1} parent=0 // pred_fallthru
    _
  // Predicated region
  $region26: #{dice_loss.1} parent=0 // pred_check
    _
  $region27: #{dice_loss.1} parent=0 // pred_check_branch
    %64 = sbr.rel (0) target = $region29
  $region28: #{dice_loss.1} parent=0 // pred_region
    _
  $region29: #{dice_loss.1} parent=0 // pred_fallthru
    _
  // Predicated region
  $region30: #{dice_loss.1} parent=0 // pred_check
    _
  $region31: #{dice_loss.1} parent=0 // pred_check_branch
    %66 = sbr.rel (0) target = $region33
  $region32: #{dice_loss.1} parent=0 // pred_region
    _
  $region33: #{dice_loss.1} parent=0 // pred_fallthru
    _

</llo_original>
